<compile_context>
chip_gen: v7x
topology: tpu7x:2x2x1
jax: 0.10.0
libtpu: 0.0.40
codegen_flags: <defaults>
</compile_context>

<pallas_src>
import functools
import math

import jax
import jax.numpy as jnp
from jax.experimental import pallas as pl
from jax.experimental.pallas import tpu as pltpu


def _cdiv(a, b):
    return -(-a // b)


def _conv1d_k2s2_matmul_kernel(x_ref, w_ref, o_ref, *, mm_dtype):
    # x_ref: (tm, P*K*C_in)  packed-input slab tile (native dtype of x)
    # w_ref: (P*K*C_in, P*C_out)  block-diagonal flattened conv weight (resident)
    # o_ref: (tm, P*C_out)  lane-dense output slab tile
    x = x_ref[...]
    if x.dtype != mm_dtype:
        # In-register cast right before the dot (hides under DMA/MXU slack);
        # never a separate wrapper-side HBM pass.
        x = x.astype(mm_dtype)
    o_ref[...] = jnp.dot(
        x, w_ref[...], preferred_element_type=jnp.float32
    ).astype(o_ref.dtype)


def conv_interp2_forward(
    x,
    w,
    *,
    compute_dtype=None,
    out_dtype=None,
    tm=None,
    vmem_tile_budget_bytes=16 * 1024 * 1024,
):
    """Pallas implementation of ConvInterp2.forward.

    x: (B, T, C_in) activations (the "NLC" input to forward, before the permute).
    w: (C_out, C_in, 2) Conv1d weight (PyTorch layout).
    compute_dtype: dtype fed to the MXU.  None (default) = x.dtype, i.e. exact f32
        semantics for f32 inputs.  Passing jnp.bfloat16 casts IN-KERNEL only.
    out_dtype: output dtype (default x.dtype).
    tm: slab-row tile size override (each slab row packs P output rows).
    returns: (B, T//2, C_out).
    """
    B, T, C_in = x.shape
    C_out, C_in_w, K = w.shape
    assert C_in_w == C_in and K == 2, "ConvInterp2 uses kernel_size=2"

    x_dtype = jnp.dtype(x.dtype)
    mm_dtype = jnp.dtype(compute_dtype) if compute_dtype is not None else x_dtype
    out_dtype = jnp.dtype(out_dtype) if out_dtype is not None else x_dtype

    # stride=2, padding=0 => T_out = (T - K)//2 + 1 == T // 2.  For odd T the last
    # frame is unused; slice it off before packing (only copies when T is odd).
    T_out = (T - K) // 2 + 1
    if T_out * K != T:
        x = x[:, : T_out * K, :]

    # ---- wrapper-side packing: contiguous reshapes only (no data movement) --------
    M = B * T_out
    # x_pair[b*T_out + t, k*C_in + ci] = x[b, 2t + k, ci]
    x_pair = x.reshape(M, K * C_in)
    # w_flat[k*C_in + ci, co] = w[co, ci, k]
    w_flat = jnp.transpose(w, (2, 1, 0)).reshape(K * C_in, C_out)

    # Lane-dense packing factor: fold P consecutive output rows into the lane axis so
    # the output block's last dim is a multiple of 128 (unmasked vst, no partial
    # stores -- the biggest measured single lever on the store path).
    P = 128 // math.gcd(C_out, 128)
    # Keep the resident block-diagonal weight small (it lives in VMEM).
    while P > 1 and (P * K * C_in) * (P * C_out) * mm_dtype.itemsize > 4 * 1024 * 1024:
        P //= 2

    # Block-diagonal weight: slab_row @ W_packed computes P independent output rows.
    # NOTE: the zero blocks are "wasted" MXU flops, but arithmetic intensity here is
    # far below the MXU roofline on every generation, so they are free -- trading them
    # away for masked stores would be a regression (per review, kept as-is).
    w_packed = jnp.kron(jnp.eye(P, dtype=w_flat.dtype), w_flat).astype(mm_dtype)

    # Pad only up to a multiple of P (<= P-1 rows, and only when actually needed).
    M_slab = _cdiv(M, P)
    pad = M_slab * P - M
    if pad:
        x_pair = jnp.pad(x_pair, ((0, pad), (0, 0)))
    x_packed = x_pair.reshape(M_slab, P * K * C_in)  # native dtype, no astype here

    in_row_bytes = P * K * C_in * x_dtype.itemsize
    out_row_bytes = P * C_out * out_dtype.itemsize
    # Sublane-packing alignment for the slab-row axis (8 for 4-byte, 16 for 2-byte).
    min_tile = max(8, 32 // x_dtype.itemsize, 32 // out_dtype.itemsize)

    if tm is None:
        # Big tiles amortize the ~0.35 us/step pipeline overhead; budget the
        # double-buffered in+out tiles (conservative for v7x's 64 MiB physical VMEM,
        # and covered by the explicit 32 MiB scoped limit below on v5e/v6e too).
        tm = vmem_tile_budget_bytes // (2 * max(in_row_bytes + out_row_bytes, 1))
        tm = min(int(tm), 8192)
    if tm >= M_slab:
        tm = M_slab  # single block spanning the full dim (always layout-legal)
    else:
        tm = max(min_tile, (int(tm) // min_tile) * min_tile)

    n_tiles = _cdiv(M_slab, tm)

    # Advisory cost hint so XLA schedules neighbors around this mem-bound custom call.
    cost = pl.CostEstimate(
        flops=2 * M * K * C_in * C_out,
        transcendentals=0,
        bytes_accessed=(
            x_packed.size * x_dtype.itemsize
            + w_packed.size * mm_dtype.itemsize
            + M_slab * P * C_out * out_dtype.itemsize
        ),
    )

    kernel = functools.partial(_conv1d_k2s2_matmul_kernel, mm_dtype=mm_dtype)

    out_slab = pl.pallas_call(
        kernel,
        out_shape=jax.ShapeDtypeStruct((M_slab, P * C_out), out_dtype),
        grid_spec=pltpu.PrefetchScalarGridSpec(
            num_scalar_prefetch=0,
            grid=(n_tiles,),
            in_specs=[
                pl.BlockSpec((tm, P * K * C_in), lambda i: (i, 0)),
                # Constant block index -> weight stays resident, no re-DMA per step.
                pl.BlockSpec((P * K * C_in, P * C_out), lambda i: (0, 0)),
            ],
            out_specs=pl.BlockSpec((tm, P * C_out), lambda i: (i, 0)),
        ),
        compiler_params=pltpu.CompilerParams(
            # Shards the M axis across TensorCores where supported (no-op on the
            # single-TC v5e/v6e).  On v7x, verify with xprof that both cores engage;
            # if not, switch to an explicit leading core axis with pltpu.CORE_PARALLEL.
            dimension_semantics=("parallel",),
            # >= the <=~24 MiB working set on all gens; raises v5e's 16 MiB scoped
            # default, stays under v7x's 64 MiB physical VMEM.
            vmem_limit_bytes=32 * 1024 * 1024,
        ),
        cost_estimate=cost,
    )(x_packed, w_packed)

    # Unpack the lane-dense slab back to (M, C_out).  The reshape is contiguous
    # (free); the trailing-row slice only happens when M % P != 0 (<= P-1 rows).
    out = out_slab.reshape(M_slab * P, C_out)
    if pad:
        out = out[:M]
    return out.reshape(B, T_out, C_out)


def _reference(x, w):
    # Pure-JAX f32 reference of the PyTorch forward:
    # y[b, t, co] = sum_{ci, k} x[b, 2t + k, ci] * w[co, ci, k]
    B, T, C_in = x.shape
    C_out, _, K = w.shape
    T_out = (T - K) // 2 + 1
    xr = x[:, : T_out * K, :].reshape(B, T_out, K, C_in).astype(jnp.float32)
    return jnp.einsum(
        "btkc,ock->bto", xr, w.astype(jnp.float32),
        precision=jax.lax.Precision.HIGHEST,
    )


if __name__ == "__main__":
    key = jax.random.PRNGKey(0)
    k1, k2, k3 = jax.random.split(key, 3)

    # --- primary small-shape demo (default exact-f32 compute path) -----------------
    B, T, C_in, C_out = 2, 16, 32, 64
    x = jax.random.normal(k1, (B, T, C_in), dtype=jnp.float32)
    # Conv1d weight, shape (out_channels, in_channels, kernel_size)
    w = jax.random.normal(k2, (C_out, C_in, 2), dtype=jnp.float32) / jnp.sqrt(2.0 * C_in)

    out = jax.block_until_ready(conv_interp2_forward(x, w))
    ref = _reference(x, w)
    assert out.shape == (B, T // 2, C_out)
    # Tolerance leaves headroom for the MXU's f32 pass decomposition.
    assert jnp.allclose(out, ref, atol=2e-2, rtol=2e-2)

    # --- stress path: odd T, M % P != 0 (tiny pad), ragged last grid block, P=8 ----
    B2, T2, Ci2, Co2 = 13, 35, 32, 48
    x2 = jax.random.normal(k3, (B2, T2, Ci2), dtype=jnp.float32)
    w2 = jax.random.normal(k2, (Co2, Ci2, 2), dtype=jnp.float32) / jnp.sqrt(2.0 * Ci2)
    out2 = jax.block_until_ready(conv_interp2_forward(x2, w2, tm=16))
    ref2 = _reference(x2, w2)
    assert out2.shape == (B2, T2 // 2, Co2)
    assert jnp.allclose(out2, ref2, atol=2e-2, rtol=2e-2)

    # --- opt-in bf16 compute / bf16 output (casts happen in-kernel only) -----------
    out_bf16 = jax.block_until_ready(
        conv_interp2_forward(x, w, compute_dtype=jnp.bfloat16, out_dtype=jnp.bfloat16)
    )
    assert out_bf16.shape == (B, T // 2, C_out)
    assert out_bf16.dtype == jnp.bfloat16
    assert jnp.allclose(out_bf16.astype(jnp.float32), ref, atol=1e-1, rtol=1e-1)

    print("KERNEL_OK")
</pallas_src>

<mosaic_0001>
module attributes {stable_mosaic.version = 11 : i64} {
  func.func @_conv1d_k2s2_matmul_kernel(%arg0: i32, %arg1: memref<8x128xf32, #tpu.memory_space<vmem>>, %arg2: memref<128x128xf32, #tpu.memory_space<vmem>>, %arg3: memref<8x128xf32, #tpu.memory_space<vmem>>) attributes {dimension_semantics = [#tpu.dimension_semantics<parallel>], iteration_bounds = array<i64: 1>, scalar_prefetch = 0 : i64, scratch_operands = 0 : i64, tpu.core_type = #tpu.core_type<tc>, window_params = [{transform_indices = @transform_0, window_bounds = array<i64: 8, 128>}, {pipeline_mode = #tpu.pipeline_mode<synchronous>, transform_indices = @transform_1, window_bounds = array<i64: 128, 128>}, {transform_indices = @transform_2, window_bounds = array<i64: 8, 128>}]} {
    %c0 = arith.constant 0 : index
    %c0_0 = arith.constant 0 : index
    %0 = vector.load %arg1[%c0, %c0_0] : memref<8x128xf32, #tpu.memory_space<vmem>>, vector<8x128xf32>
    %c0_1 = arith.constant 0 : index
    %c0_2 = arith.constant 0 : index
    %1 = vector.load %arg2[%c0_1, %c0_2] : memref<128x128xf32, #tpu.memory_space<vmem>>, vector<128x128xf32>
    %cst = arith.constant dense<0.000000e+00> : vector<8x128xf32>
    %2 = tpu.matmul %0, %1, %cst {dimension_numbers = #tpu.dot_dimension_numbers<[1], [0], [0], [1], [0, 0, 1, 1], [], []>} : vector<8x128xf32>, vector<128x128xf32>, vector<8x128xf32> -> vector<8x128xf32>
    %c0_3 = arith.constant 0 : index
    %c0_4 = arith.constant 0 : index
    %3 = vector.load %arg3[%c0_3, %c0_4] : memref<8x128xf32, #tpu.memory_space<vmem>>, vector<8x128xf32>
    tpu.vector_store %arg3[%c0_3, %c0_4], %2 {strides = array<i32>} : memref<8x128xf32, #tpu.memory_space<vmem>>, vector<8x128xf32>,
    return
  }
  func.func @transform_0(%arg0: i32) -> (i32, i32) {
    %c0_i32 = arith.constant 0 : i32
    %c0_i32_0 = arith.constant 0 : i32
    return %arg0, %c0_i32 : i32, i32
  }
  func.func @transform_1(%arg0: i32) -> (i32, i32) {
    %c0_i32 = arith.constant 0 : i32
    %c0_i32_0 = arith.constant 0 : i32
    %c0_i32_1 = arith.constant 0 : i32
    return %c0_i32, %c0_i32_0 : i32, i32
  }
  func.func @transform_2(%arg0: i32) -> (i32, i32) {
    %c0_i32 = arith.constant 0 : i32
    %c0_i32_0 = arith.constant 0 : i32
    return %arg0, %c0_i32 : i32, i32
  }
}

</mosaic_0001>

<llo_original>
// kernel: tpu_custom_call.1
$region0: #{tpu_custom_call.1}
  #allocation0 [shape = 'u32[]', space=smem, size = 0x4, offset = 0x4, fixed_abs, tag = 'smem constant byte address 0x4 - core index']
  #allocation1 [shape = 'u32[144,128]{1,0:T(1,128)}', space=vmem, size = 0x12000, scoped, tag = 'internal scratch']
  %s0 = inlined_call_operand.hbm [shape: f32[8,128], index: 0, kind: input, shape index: {}]
  %s1 = inlined_call_operand.hbm [shape: f32[128,128], index: 1, kind: input, shape index: {}]
  %s2 = inlined_call_operand.hbm [shape: f32[8,128], index: 2, kind: output, shape index: {}]
  %s3 = sld [smem:[#allocation0]]
  $region26: #{tpu_custom_call.1} parent=0
    _
  %s5 = ssub.s32 1, %s3
  %s6 = scalar_select 0, %s5, %s3
  $region1: #{tpu_custom_call.1} parent=0
    #allocation2 [shape = 'u8[4096]{0}', space=vmem, size = 0x1000, scoped, tag = 'input window, operand 0, single buffered']
    #allocation3 [shape = 's32[1]{0}', space=sflag, size = 0x4, scoped, tag = 'scoped memory for tpu_custom_call.1']
    #allocation4 [shape = 's32[1]{0}', space=sflag, size = 0x4, scoped, tag = 'scoped memory for tpu_custom_call.1']
    #allocation5 [shape = 'u8[65536]{0}', space=vmem, size = 0x10000, scoped, tag = 'input window, operand 1, single buffered']
    #allocation6 [shape = 's32[1]{0}', space=sflag, size = 0x4, scoped, tag = 'scoped memory for tpu_custom_call.1']
    #allocation7 [shape = 'u8[4096]{0}', space=vmem, size = 0x1000, scoped, tag = 'output window, operand 0, single buffered']
    %7 = vsyncpa [#allocation3], 0
    %8 = vsyncpa [#allocation6], 0
    %9 = vsyncpa [#allocation4], 0
    // Predicated region
    $region2: #{tpu_custom_call.1} parent=1 // pred_check
      _
    $region3: #{tpu_custom_call.1} parent=1 // pred_check_branch
      %11 = sbr.rel (0) target = $region5
    $region4: #{tpu_custom_call.1} parent=1 // pred_region
      %s13 = ssub.s32 128, 128
      %14 = vsyncadd [#allocation3], %s13
      %s16 = sshll.u32 [#allocation2], 4
      %s17 = int_to_ptr.vmem [resolvable:$true] %s16
      %19 = dma.hbm_to_vmem [thread:$0]  %s0, 128, %s17, [#allocation3]
    $region5: #{tpu_custom_call.1} parent=1 // pred_fallthru
      _
    // Predicated region
    $region6: #{tpu_custom_call.1} parent=1 // pred_check
      _
    $region7: #{tpu_custom_call.1} parent=1 // pred_check_branch
      %21 = sbr.rel (0) target = $region9
    $region8: #{tpu_custom_call.1} parent=1 // pred_region
      %s23 = ssub.s32 2048, 2048
      %24 = vsyncadd [#allocation6], %s23
      %s25 = sshll.u32 [#allocation5], 4
      %s26 = int_to_ptr.vmem [resolvable:$true] %s25
      %31 = dma.hbm_to_vmem [thread:$0]  %s1, 2048, %s26, [#allocation6], 128, 128, 8
    $region9: #{tpu_custom_call.1} parent=1 // pred_fallthru
      _
    // Predicated region
    $region10: #{tpu_custom_call.1} parent=1 // pred_check
      _
    $region11: #{tpu_custom_call.1} parent=1 // pred_check_branch
      %33 = sbr.rel (0) target = $region13
    $region12: #{tpu_custom_call.1} parent=1 // pred_region
      %34 = dma.done [#allocation3], 128
    $region13: #{tpu_custom_call.1} parent=1 // pred_fallthru
      _
    // Predicated region
    $region14: #{tpu_custom_call.1} parent=1 // pred_check
      _
    $region15: #{tpu_custom_call.1} parent=1 // pred_check_branch
      %36 = sbr.rel (0) target = $region17
    $region16: #{tpu_custom_call.1} parent=1 // pred_region
      %37 = dma.done [#allocation6], 2048
    $region17: #{tpu_custom_call.1} parent=1 // pred_fallthru
      _
    %v38 = vld [vmem:[#allocation2] sm:$0xff]
    %v39 = vld [vmem:[#allocation5] sm:$0xff]
    %v40 = vld [vmem:[#allocation5 + $0x8] sm:$0xff]
    %v41 = vld [vmem:[#allocation5 + $0x10] sm:$0xff]
    %v42 = vld [vmem:[#allocation5 + $0x18] sm:$0xff]
    %v43 = vld [vmem:[#allocation5 + $0x20] sm:$0xff]
    %v44 = vld [vmem:[#allocation5 + $0x28] sm:$0xff]
    %v45 = vld [vmem:[#allocation5 + $0x30] sm:$0xff]
    %v46 = vld [vmem:[#allocation5 + $0x38] sm:$0xff]
    %v47 = vld [vmem:[#allocation5 + $0x40] sm:$0xff]
    %v48 = vld [vmem:[#allocation5 + $0x48] sm:$0xff]
    %v49 = vld [vmem:[#allocation5 + $0x50] sm:$0xff]
    %v50 = vld [vmem:[#allocation5 + $0x58] sm:$0xff]
    %v51 = vld [vmem:[#allocation5 + $0x60] sm:$0xff]
    %v52 = vld [vmem:[#allocation5 + $0x68] sm:$0xff]
    %v53 = vld [vmem:[#allocation5 + $0x70] sm:$0xff]
    %v54 = vld [vmem:[#allocation5 + $0x78] sm:$0xff]
    %55 = vmatprep.subr.mxu0 0.0
    %56 = vmatpush1.msra.mxu0 %v39
    %57 = vmatprep.subr.mxu0 0.0
    %58 = vmatpush1.msra.mxu0 %v40
    %59 = vmatprep.subr.mxu0 0.0
    %60 = vmatpush1.msra.mxu0 %v41
    %61 = vmatprep.subr.mxu0 0.0
    %62 = vmatpush1.msra.mxu0 %v42
    %63 = vmatprep.subr.mxu0 0.0
    %64 = vmatpush1.msra.mxu0 %v43
    %65 = vmatprep.subr.mxu0 0.0
    %66 = vmatpush1.msra.mxu0 %v44
    %67 = vmatprep.subr.mxu0 0.0
    %68 = vmatpush1.msra.mxu0 %v45
    %69 = vmatprep.subr.mxu0 0.0
    %70 = vmatpush1.msra.mxu0 %v46
    %71 = vmatprep.subr.mxu0 0.0
    %72 = vmatpush1.msra.mxu0 %v47
    %73 = vmatprep.subr.mxu0 0.0
    %74 = vmatpush1.msra.mxu0 %v48
    %75 = vmatprep.subr.mxu0 0.0
    %76 = vmatpush1.msra.mxu0 %v49
    %77 = vmatprep.subr.mxu0 0.0
    %78 = vmatpush1.msra.mxu0 %v50
    %79 = vmatprep.subr.mxu0 0.0
    %80 = vmatpush1.msra.mxu0 %v51
    %81 = vmatprep.subr.mxu0 0.0
    %82 = vmatpush1.msra.mxu0 %v52
    %83 = vmatprep.subr.mxu0 0.0
    %84 = vmatpush1.msra.mxu0 %v53
    %85 = vmatprep.subr.mxu0 0.0
    %86 = vmatpush1.msra.mxu0 %v54
    %87 = vmatprep.subr.mxu0 0.0
    %88 = vmatpush1.msra.mxu0 0.0
    %89 = vmatprep.subr.mxu0 0.0
    %90 = vmatpush1.msra.mxu0 0.0
    %91 = vmatprep.subr.mxu0 0.0
    %92 = vmatpush1.msra.mxu0 0.0
    %93 = vmatprep.subr.mxu0 0.0
    %94 = vmatpush1.msra.mxu0 0.0
    %95 = vmatprep.subr.mxu0 0.0
    %96 = vmatpush1.msra.mxu0 0.0
    %97 = vmatprep.subr.mxu0 0.0
    %98 = vmatpush1.msra.mxu0 0.0
    %99 = vmatprep.subr.mxu0 0.0
    %100 = vmatpush1.msra.mxu0 0.0
    %101 = vmatprep.subr.mxu0 0.0
    %102 = vmatpush1.msra.mxu0 0.0
    %103 = vmatprep.subr.mxu0 0.0
    %104 = vmatpush1.msra.mxu0 0.0
    %105 = vmatprep.subr.mxu0 0.0
    %106 = vmatpush1.msra.mxu0 0.0
    %107 = vmatprep.subr.mxu0 0.0
    %108 = vmatpush1.msra.mxu0 0.0
    %109 = vmatprep.subr.mxu0 0.0
    %110 = vmatpush1.msra.mxu0 0.0
    %111 = vmatprep.subr.mxu0 0.0
    %112 = vmatpush1.msra.mxu0 0.0
    %113 = vmatprep.subr.mxu0 0.0
    %114 = vmatpush1.msra.mxu0 0.0
    %115 = vmatprep.subr.mxu0 0.0
    %116 = vmatpush1.msra.mxu0 0.0
    %117 = vmatprep.subr.mxu0 0.0
    %118 = vmatpush1.msra.mxu0 0.0
    %119 = vmatprep.mubr.f32.mxu0 0.0
    %120 = vmatmul.mubr.f32.gmra.mrb[0].mxu0 %v38
    %v121 = vpop.f32.mrb[0].mxu0
    %v122 = vadd.f32 0.0, %v121
    %v123 = vpop.f32.mrb[0].mxu0
    %124 = vdwg.mxu0
    %125 = vst [vmem:[#allocation7] sm:$0xff] %v122
    // Predicated region
    $region18: #{tpu_custom_call.1} parent=1 // pred_check
      _
    $region19: #{tpu_custom_call.1} parent=1 // pred_check_branch
      %127 = sbr.rel (0) target = $region21
    $region20: #{tpu_custom_call.1} parent=1 // pred_region
      %s129 = ssub.s32 128, 128
      %130 = vsyncadd [#allocation4], %s129
      %s132 = sshll.u32 [#allocation7], 4
      %s133 = int_to_ptr.vmem [resolvable:$true] %s132
      %135 = dma.vmem_to_hbm [thread:$0]  %s133, 128, %s2, [#allocation4]
    $region21: #{tpu_custom_call.1} parent=1 // pred_fallthru
      _
    // Predicated region
    $region22: #{tpu_custom_call.1} parent=1 // pred_check
      _
    $region23: #{tpu_custom_call.1} parent=1 // pred_check_branch
      %137 = sbr.rel (0) target = $region25
    $region24: #{tpu_custom_call.1} parent=1 // pred_region
      %138 = dma.done [#allocation4], 128
    $region25: #{tpu_custom_call.1} parent=1 // pred_fallthru
      _
    %139 = vsyncpa [#allocation3], 1
    %140 = vsyncpa [#allocation6], 1
    %141 = vsyncpa [#allocation4], 1

</llo_original>
